<compile_context>
chip_gen: v7x
topology: tpu7x:2x2x1
jax: 0.10.0
libtpu: 0.0.40
codegen_flags: <defaults>
</compile_context>

<pallas_src>
import jax
import jax.numpy as jnp
from jax.experimental import pallas as pl
from jax.experimental.pallas import tpu as pltpu


def _round_up(x, m):
    return ((x + m - 1) // m) * m


def _make_dice_kernel(valid_rows, tile_rows, needs_mask):
    """Builds the accumulation kernel.

    Block shapes seen by the kernel:
      yt_ref / yp_ref : (bn, tile_rows, 128)   input tiles
      tp_ref / s_ref  : (bn, 8, 128) f32       per-sample partial accumulators
    """

    def kernel(yt_ref, yp_ref, tp_ref, s_ref):
        k = pl.program_id(1)

        @pl.when(k == 0)
        def _():
            tp_ref[...] = jnp.zeros_like(tp_ref)
            s_ref[...] = jnp.zeros_like(s_ref)

        # Cast in-kernel (keeps HBM traffic at the input dtype's width).
        yt = yt_ref[...].astype(jnp.float32)
        yp = yp_ref[...].astype(jnp.float32)

        if needs_mask:
            # The last row-block may run past the end of the (un-padded) array:
            # rows >= valid_rows - k*tile_rows hold junk, so zero them out
            # (zero is sum-neutral for both accumulated quantities).
            rows_left = valid_rows - k * tile_rows
            row_ids = jax.lax.broadcasted_iota(jnp.int32, yt.shape, 1)
            in_bounds = row_ids < rows_left
            yt = jnp.where(in_bounds, yt, 0.0)
            yp = jnp.where(in_bounds, yp, 0.0)

        bn = yt.shape[0]
        # Fold rows into (bn, g, 8, 128): every (8, 128) slice is one full f32
        # vreg, so the axis-1 sums below are plain vreg-wise VPU adds — no
        # cross-lane XLU reductions and no lane-sparse accumulator stores.
        prod = (yt * yp).reshape(bn, -1, 8, 128)
        ssum = (yt + yp).reshape(bn, -1, 8, 128)
        tp_ref[...] += jnp.sum(prod, axis=1)
        s_ref[...] += jnp.sum(ssum, axis=1)

    return kernel


def dice_loss(y_true, y_pred, eps=1e-5, max_rows=8192):
    """Pallas equivalent of DiceLoss.forward(y_true, y_pred) (NCHW inputs)."""
    N = y_pred.shape[0]
    yt = y_true.reshape(N, -1)
    yp = y_pred.reshape(N, -1)
    D = yp.shape[1]

    # Row budget per block (multiple of 8 sublanes). 8192 rows x 128 lanes of
    # f32 = 4 MiB per input block -> 2 inputs x 2 pipeline buffers = 16 MiB,
    # comfortably under the 32 MiB scoped-VMEM we request (v5e/v6e/v7x safe).
    max_rows = max(8, (max_rows // 8) * 8)

    # The kernel wants a lane/sublane-dense (N, rows, 128) view. That reshape
    # is free when D is a multiple of 128; otherwise (or when a sample has
    # fewer than 8 rows) pad with zeros, which is sum-neutral.
    if D % 128 != 0 or D < 8 * 128:
        dp = max(_round_up(D, 128), 8 * 128)
        # TODO(synk): mask the lane tail in-kernel instead of this HBM pad copy.
        yt = jnp.pad(yt, ((0, 0), (0, dp - D)))
        yp = jnp.pad(yp, ((0, 0), (0, dp - D)))
        D = dp
    rows = D // 128

    if rows <= max_rows and rows % 8 == 0:
        # Whole sample fits in one row-block; pack several samples per grid
        # step so tiny-sample / large-batch cases aren't grid-step-overhead
        # bound. bn must divide N (no partial blocks on the sample axis).
        tile_rows, n_k, needs_mask = rows, 1, False
        bn_cap = max(1, min(256, max_rows // rows))
        bn = next(d for d in range(min(N, bn_cap), 0, -1) if N % d == 0)
    else:
        # Stream each sample through multiple row-blocks; the ragged last
        # block (if any) is masked in-kernel instead of padding HBM copies.
        bn = 1
        tile_rows = min((rows // 8) * 8, max_rows)
        n_k = pl.cdiv(rows, tile_rows)
        needs_mask = (rows % tile_rows) != 0

    yt3 = yt.reshape(N, rows, 128)
    yp3 = yp.reshape(N, rows, 128)

    kernel = _make_dice_kernel(rows, tile_rows, needs_mask)

    tp_out, s_out = pl.pallas_call(
        kernel,
        out_shape=(
            jax.ShapeDtypeStruct((N, 8, 128), jnp.float32),
            jax.ShapeDtypeStruct((N, 8, 128), jnp.float32),
        ),
        grid=(N // bn, n_k),
        in_specs=[
            pl.BlockSpec((bn, tile_rows, 128), lambda nb, k: (nb, k, 0)),
            pl.BlockSpec((bn, tile_rows, 128), lambda nb, k: (nb, k, 0)),
        ],
        out_specs=(
            pl.BlockSpec((bn, 8, 128), lambda nb, k: (nb, 0, 0)),
            pl.BlockSpec((bn, 8, 128), lambda nb, k: (nb, 0, 0)),
        ),
        compiler_params=pltpu.CompilerParams(
            dimension_semantics=("parallel", "arbitrary"),
            vmem_limit_bytes=32 * 1024 * 1024,
        ),
    )(yt3, yp3)

    # Tiny finalization (N * 1024 values) outside the kernel.
    tp = tp_out.reshape(N, -1).sum(axis=-1)
    s = s_out.reshape(N, -1).sum(axis=-1)
    dice_coef = (2.0 * tp + eps) / (s + eps)    # s == 2*tp + fp + fn
    return jnp.mean(1.0 - dice_coef)


def dice_loss_ref(y_true, y_pred, eps=1e-5):
    """Pure-JAX reference mirroring the PyTorch module."""
    N = y_pred.shape[0]
    yt = y_true.reshape(N, -1).astype(jnp.float32)
    yp = y_pred.reshape(N, -1).astype(jnp.float32)
    tp = jnp.sum(yt * yp, axis=1)
    fp = jnp.sum(yp, axis=1) - tp
    fn = jnp.sum(yt, axis=1) - tp
    dice_coef = (2.0 * tp + eps) / (2.0 * tp + fp + fn + eps)
    return jnp.mean(1.0 - dice_coef)


if __name__ == "__main__":
    key = jax.random.PRNGKey(0)
    k1, k2, k3, k4 = jax.random.split(key, 4)

    # Primary check: NCHW batch=2, channels=4, spatial=16x16 (D = 1024).
    y_true = (jax.random.uniform(k1, (2, 4, 16, 16)) > 0.5).astype(jnp.float32)
    y_pred = jax.random.uniform(k2, (2, 4, 16, 16), dtype=jnp.float32)
    out = jax.block_until_ready(dice_loss(y_true, y_pred))
    ref = dice_loss_ref(y_true, y_pred)
    assert jnp.allclose(out, ref, rtol=1e-5, atol=1e-6), (out, ref)

    # Secondary check: exercises the multi-row-block path with an in-kernel
    # masked ragged tail (rows=24 per sample, forced tile_rows=16 -> 2 blocks).
    y_true2 = (jax.random.uniform(k3, (2, 2, 32, 48)) > 0.5).astype(jnp.float32)
    y_pred2 = jax.random.uniform(k4, (2, 2, 32, 48), dtype=jnp.float32)
    out2 = jax.block_until_ready(dice_loss(y_true2, y_pred2, max_rows=16))
    ref2 = dice_loss_ref(y_true2, y_pred2)
    assert jnp.allclose(out2, ref2, rtol=1e-5, atol=1e-6), (out2, ref2)

    print("KERNEL_OK")
</pallas_src>

<mosaic_0001>
module attributes {stable_mosaic.version = 11 : i64} {
  func.func @kernel(%arg0: i32, %arg1: i32, %arg2: memref<2x8x128xf32, #tpu.memory_space<vmem>>, %arg3: memref<2x8x128xf32, #tpu.memory_space<vmem>>, %arg4: memref<2x8x128xf32, #tpu.memory_space<vmem>>, %arg5: memref<2x8x128xf32, #tpu.memory_space<vmem>>) attributes {dimension_semantics = [#tpu.dimension_semantics<parallel>, #tpu.dimension_semantics<arbitrary>], iteration_bounds = array<i64: 1, 1>, scalar_prefetch = 0 : i64, scratch_operands = 0 : i64, tpu.core_type = #tpu.core_type<tc>, window_params = [{transform_indices = @transform_0, window_bounds = array<i64: 2, 8, 128>}, {transform_indices = @transform_1, window_bounds = array<i64: 2, 8, 128>}, {transform_indices = @transform_2, window_bounds = array<i64: 2, 8, 128>}, {transform_indices = @transform_3, window_bounds = array<i64: 2, 8, 128>}]} {
    %c0_i32 = arith.constant 0 : i32
    %0 = arith.cmpi eq, %arg1, %c0_i32 : i32
    %1 = arith.extui %0 : i1 to i32
    %c0_i32_0 = arith.constant 0 : i32
    %2 = arith.cmpi ne, %1, %c0_i32_0 : i32
    scf.if %2 {
      %cst_19 = arith.constant 0.000000e+00 : f32
      %17 = vector.broadcast %cst_19 : f32 to vector<2x8x128xf32>
      %c0_20 = arith.constant 0 : index
      %c0_21 = arith.constant 0 : index
      %c0_22 = arith.constant 0 : index
      %18 = vector.load %arg4[%c0_20, %c0_21, %c0_22] : memref<2x8x128xf32, #tpu.memory_space<vmem>>, vector<2x8x128xf32>
      tpu.vector_store %arg4[%c0_20, %c0_21, %c0_22], %17 {strides = array<i32>} : memref<2x8x128xf32, #tpu.memory_space<vmem>>, vector<2x8x128xf32>,
      %cst_23 = arith.constant 0.000000e+00 : f32
      %19 = vector.broadcast %cst_23 : f32 to vector<2x8x128xf32>
      %c0_24 = arith.constant 0 : index
      %c0_25 = arith.constant 0 : index
      %c0_26 = arith.constant 0 : index
      %20 = vector.load %arg5[%c0_24, %c0_25, %c0_26] : memref<2x8x128xf32, #tpu.memory_space<vmem>>, vector<2x8x128xf32>
      tpu.vector_store %arg5[%c0_24, %c0_25, %c0_26], %19 {strides = array<i32>} : memref<2x8x128xf32, #tpu.memory_space<vmem>>, vector<2x8x128xf32>,
    } else {
    }
    %c0 = arith.constant 0 : index
    %c0_1 = arith.constant 0 : index
    %c0_2 = arith.constant 0 : index
    %3 = vector.load %arg2[%c0, %c0_1, %c0_2] : memref<2x8x128xf32, #tpu.memory_space<vmem>>, vector<2x8x128xf32>
    %c0_3 = arith.constant 0 : index
    %c0_4 = arith.constant 0 : index
    %c0_5 = arith.constant 0 : index
    %4 = vector.load %arg3[%c0_3, %c0_4, %c0_5] : memref<2x8x128xf32, #tpu.memory_space<vmem>>, vector<2x8x128xf32>
    %5 = arith.mulf %3, %4 : vector<2x8x128xf32>
    %6 = vector.shape_cast %5 : vector<2x8x128xf32> to vector<2x1x8x128xf32>
    %7 = arith.addf %3, %4 : vector<2x8x128xf32>
    %8 = vector.shape_cast %7 : vector<2x8x128xf32> to vector<2x1x8x128xf32>
    %c0_6 = arith.constant 0 : index
    %c0_7 = arith.constant 0 : index
    %c0_8 = arith.constant 0 : index
    %9 = vector.load %arg4[%c0_6, %c0_7, %c0_8] : memref<2x8x128xf32, #tpu.memory_space<vmem>>, vector<2x8x128xf32>
    %cst = arith.constant dense<0.000000e+00> : vector<2x8x128xf32>
    %10 = vector.multi_reduction <add>, %6, %cst [1] : vector<2x1x8x128xf32> to vector<2x8x128xf32>
    %11 = arith.addf %9, %10 : vector<2x8x128xf32>
    %c0_9 = arith.constant 0 : index
    %c0_10 = arith.constant 0 : index
    %c0_11 = arith.constant 0 : index
    %12 = vector.load %arg4[%c0_9, %c0_10, %c0_11] : memref<2x8x128xf32, #tpu.memory_space<vmem>>, vector<2x8x128xf32>
    tpu.vector_store %arg4[%c0_9, %c0_10, %c0_11], %11 {strides = array<i32>} : memref<2x8x128xf32, #tpu.memory_space<vmem>>, vector<2x8x128xf32>,
    %c0_12 = arith.constant 0 : index
    %c0_13 = arith.constant 0 : index
    %c0_14 = arith.constant 0 : index
    %13 = vector.load %arg5[%c0_12, %c0_13, %c0_14] : memref<2x8x128xf32, #tpu.memory_space<vmem>>, vector<2x8x128xf32>
    %cst_15 = arith.constant dense<0.000000e+00> : vector<2x8x128xf32>
    %14 = vector.multi_reduction <add>, %8, %cst_15 [1] : vector<2x1x8x128xf32> to vector<2x8x128xf32>
    %15 = arith.addf %13, %14 : vector<2x8x128xf32>
    %c0_16 = arith.constant 0 : index
    %c0_17 = arith.constant 0 : index
    %c0_18 = arith.constant 0 : index
    %16 = vector.load %arg5[%c0_16, %c0_17, %c0_18] : memref<2x8x128xf32, #tpu.memory_space<vmem>>, vector<2x8x128xf32>
    tpu.vector_store %arg5[%c0_16, %c0_17, %c0_18], %15 {strides = array<i32>} : memref<2x8x128xf32, #tpu.memory_space<vmem>>, vector<2x8x128xf32>,
    return
  }
  func.func @transform_0(%arg0: i32, %arg1: i32) -> (i32, i32, i32) {
    %c0_i32 = arith.constant 0 : i32
    %c0_i32_0 = arith.constant 0 : i32
    return %arg0, %arg1, %c0_i32 : i32, i32, i32
  }
  func.func @transform_1(%arg0: i32, %arg1: i32) -> (i32, i32, i32) {
    %c0_i32 = arith.constant 0 : i32
    %c0_i32_0 = arith.constant 0 : i32
    return %arg0, %arg1, %c0_i32 : i32, i32, i32
  }
  func.func @transform_2(%arg0: i32, %arg1: i32) -> (i32, i32, i32) {
    %c0_i32 = arith.constant 0 : i32
    %c0_i32_0 = arith.constant 0 : i32
    %c0_i32_1 = arith.constant 0 : i32
    return %arg0, %c0_i32, %c0_i32_0 : i32, i32, i32
  }
  func.func @transform_3(%arg0: i32, %arg1: i32) -> (i32, i32, i32) {
    %c0_i32 = arith.constant 0 : i32
    %c0_i32_0 = arith.constant 0 : i32
    %c0_i32_1 = arith.constant 0 : i32
    return %arg0, %c0_i32, %c0_i32_0 : i32, i32, i32
  }
}

</mosaic_0001>

<llo_original>
// kernel: tpu_custom_call.1
$region0: #{tpu_custom_call.1}
  #allocation0 [shape = 'u32[]', space=smem, size = 0x4, offset = 0x4, fixed_abs, tag = 'smem constant byte address 0x4 - core index']
  #allocation1 [shape = 'u32[144,128]{1,0:T(1,128)}', space=vmem, size = 0x12000, scoped, tag = 'internal scratch']
  %s0 = inlined_call_operand.hbm [shape: f32[2,8,128], index: 0, kind: input, shape index: {}]
  %s1 = inlined_call_operand.hbm [shape: f32[2,8,128], index: 1, kind: input, shape index: {}]
  %s2 = inlined_call_operand.hbm [shape: f32[2,8,128], index: 2, kind: output, shape index: {0}]
  %s3 = inlined_call_operand.hbm [shape: f32[2,8,128], index: 3, kind: output, shape index: {1}]
  %4 = xla_tuple %s2, %s3
  %s5 = sld [smem:[#allocation0]]
  $region38: #{tpu_custom_call.1} parent=0
    _
  %s7 = ssub.s32 1, %s5
  %s8 = scalar_select 0, %s7, %s5
  $region1: #{tpu_custom_call.1} parent=0
    #allocation2 [shape = 'u8[8192]{0}', space=vmem, size = 0x2000, scoped, tag = 'input window, operand 0, single buffered']
    #allocation3 [shape = 's32[1]{0}', space=sflag, size = 0x4, scoped, tag = 'scoped memory for tpu_custom_call.1']
    #allocation4 [shape = 's32[1]{0}', space=sflag, size = 0x4, scoped, tag = 'scoped memory for tpu_custom_call.1']
    #allocation5 [shape = 'u8[8192]{0}', space=vmem, size = 0x2000, scoped, tag = 'input window, operand 1, single buffered']
    #allocation6 [shape = 's32[1]{0}', space=sflag, size = 0x4, scoped, tag = 'scoped memory for tpu_custom_call.1']
    #allocation7 [shape = 'u8[8192]{0}', space=vmem, size = 0x2000, scoped, tag = 'output window, operand 0, single buffered']
    #allocation8 [shape = 'u8[8192]{0}', space=vmem, size = 0x2000, scoped, tag = 'output window, operand 1, single buffered']
    #allocation9 [shape = 's32[1]{0}', space=sflag, size = 0x4, scoped, tag = 'scoped memory for tpu_custom_call.1']
    %9 = vsyncpa [#allocation3], 0
    %10 = vsyncpa [#allocation6], 0
    %11 = vsyncpa [#allocation4], 0
    %12 = vsyncpa [#allocation9], 0
    // Predicated region
    $region2: #{tpu_custom_call.1} parent=1 // pred_check
      _
    $region3: #{tpu_custom_call.1} parent=1 // pred_check_branch
      %14 = sbr.rel (0) target = $region5
    $region4: #{tpu_custom_call.1} parent=1 // pred_region
      %s16 = ssub.s32 256, 256
      %17 = vsyncadd [#allocation3], %s16
      %s18 = sshll.u32 [#allocation2], 4
      %s19 = int_to_ptr.vmem [resolvable:$true] %s18
      %24 = dma.hbm_to_vmem [thread:$0]  %s0, 256, %s19, [#allocation3], 128, 128, 8
    $region5: #{tpu_custom_call.1} parent=1 // pred_fallthru
      _
    // Predicated region
    $region6: #{tpu_custom_call.1} parent=1 // pred_check
      _
    $region7: #{tpu_custom_call.1} parent=1 // pred_check_branch
      %26 = sbr.rel (0) target = $region9
    $region8: #{tpu_custom_call.1} parent=1 // pred_region
      %s28 = ssub.s32 256, 256
      %29 = vsyncadd [#allocation6], %s28
      %s30 = sshll.u32 [#allocation5], 4
      %s31 = int_to_ptr.vmem [resolvable:$true] %s30
      %36 = dma.hbm_to_vmem [thread:$0]  %s1, 256, %s31, [#allocation6], 128, 128, 8
    $region9: #{tpu_custom_call.1} parent=1 // pred_fallthru
      _
    // Predicated region
    $region10: #{tpu_custom_call.1} parent=1 // pred_check
      _
    $region11: #{tpu_custom_call.1} parent=1 // pred_check_branch
      %38 = sbr.rel (0) target = $region13
    $region12: #{tpu_custom_call.1} parent=1 // pred_region
      %39 = dma.done [#allocation3], 256
    $region13: #{tpu_custom_call.1} parent=1 // pred_fallthru
      _
    // Predicated region
    $region14: #{tpu_custom_call.1} parent=1 // pred_check
      _
    $region15: #{tpu_custom_call.1} parent=1 // pred_check_branch
      %41 = sbr.rel (0) target = $region17
    $region16: #{tpu_custom_call.1} parent=1 // pred_region
      %42 = dma.done [#allocation6], 256
    $region17: #{tpu_custom_call.1} parent=1 // pred_fallthru
      _
    %p43 = scmp.eq.s32.totalorder 0, 0
    // Predicated region
    $region18: #{tpu_custom_call.1} parent=1 // pred_check
      %p44 = pneg %p43
    $region19: #{tpu_custom_call.1} parent=1 // pred_check_branch
      %46 = sbr.rel (%p44) target = $region21
    $region20: #{tpu_custom_call.1} parent=1 // pred_region
      %47 = vst [vmem:[#allocation7] sm:$0xff] 0.0
      %48 = vst [vmem:[#allocation7 + $0x8] sm:$0xff] 0.0
      %49 = vst [vmem:[#allocation8] sm:$0xff] 0.0
      %50 = vst [vmem:[#allocation8 + $0x8] sm:$0xff] 0.0
    $region21: #{tpu_custom_call.1} parent=1 // pred_fallthru
      _
    %v51 = vld [vmem:[#allocation2] sm:$0xff]
    %v52 = vld [vmem:[#allocation2 + $0x8] sm:$0xff]
    %v53 = vld [vmem:[#allocation5] sm:$0xff]
    %v54 = vld [vmem:[#allocation5 + $0x8] sm:$0xff]
    %v55 = vmul.f32 %v51, %v53
    %v56 = vmul.f32 %v52, %v54
    %v57 = vadd.f32 %v51, %v53
    %v58 = vadd.f32 %v52, %v54
    %v59 = vld [vmem:[#allocation7] sm:$0xff]
    %v60 = vld [vmem:[#allocation7 + $0x8] sm:$0xff]
    %v61 = vadd.f32 %v55, 0.0
    %v62 = vadd.f32 %v56, 0.0
    %v63 = vadd.f32 %v59, %v61
    %v64 = vadd.f32 %v60, %v62
    %65 = vst [vmem:[#allocation7] sm:$0xff] %v63
    %66 = vst [vmem:[#allocation7 + $0x8] sm:$0xff] %v64
    %v67 = vld [vmem:[#allocation8] sm:$0xff]
    %v68 = vld [vmem:[#allocation8 + $0x8] sm:$0xff]
    %v69 = vadd.f32 %v57, 0.0
    %v70 = vadd.f32 %v58, 0.0
    %v71 = vadd.f32 %v67, %v69
    %v72 = vadd.f32 %v68, %v70
    %73 = vst [vmem:[#allocation8] sm:$0xff] %v71
    %74 = vst [vmem:[#allocation8 + $0x8] sm:$0xff] %v72
    // Predicated region
    $region22: #{tpu_custom_call.1} parent=1 // pred_check
      _
    $region23: #{tpu_custom_call.1} parent=1 // pred_check_branch
      %76 = sbr.rel (0) target = $region25
    $region24: #{tpu_custom_call.1} parent=1 // pred_region
      %s78 = ssub.s32 256, 256
      %79 = vsyncadd [#allocation4], %s78
      %s80 = sshll.u32 [#allocation7], 4
      %s81 = int_to_ptr.vmem [resolvable:$true] %s80
      %86 = dma.vmem_to_hbm [thread:$0]  %s81, 256, %s2, [#allocation4], 128, 128, 8
    $region25: #{tpu_custom_call.1} parent=1 // pred_fallthru
      _
    // Predicated region
    $region26: #{tpu_custom_call.1} parent=1 // pred_check
      _
    $region27: #{tpu_custom_call.1} parent=1 // pred_check_branch
      %88 = sbr.rel (0) target = $region29
    $region28: #{tpu_custom_call.1} parent=1 // pred_region
      %s90 = ssub.s32 256, 256
      %91 = vsyncadd [#allocation9], %s90
      %s92 = sshll.u32 [#allocation8], 4
      %s93 = int_to_ptr.vmem [resolvable:$true] %s92
      %98 = dma.vmem_to_hbm [thread:$0]  %s93, 256, %s3, [#allocation9], 128, 128, 8
    $region29: #{tpu_custom_call.1} parent=1 // pred_fallthru
      _
    // Predicated region
    $region30: #{tpu_custom_call.1} parent=1 // pred_check
      _
    $region31: #{tpu_custom_call.1} parent=1 // pred_check_branch
      %100 = sbr.rel (0) target = $region33
    $region32: #{tpu_custom_call.1} parent=1 // pred_region
      %101 = dma.done [#allocation4], 256
    $region33: #{tpu_custom_call.1} parent=1 // pred_fallthru
      _
    // Predicated region
    $region34: #{tpu_custom_call.1} parent=1 // pred_check
      _
    $region35: #{tpu_custom_call.1} parent=1 // pred_check_branch
      %103 = sbr.rel (0) target = $region37
    $region36: #{tpu_custom_call.1} parent=1 // pred_region
      %104 = dma.done [#allocation9], 256
    $region37: #{tpu_custom_call.1} parent=1 // pred_fallthru
      _
    %105 = vsyncpa [#allocation3], 1
    %106 = vsyncpa [#allocation6], 1
    %107 = vsyncpa [#allocation4], 1
    %108 = vsyncpa [#allocation9], 1

</llo_original>
